<compile_context>
chip_gen: v7x
topology: tpu7x:2x2x1
jax: 0.10.0
libtpu: 0.0.40
codegen_flags: <defaults>
</compile_context>

<pallas_src>
import functools

import jax
import jax.numpy as jnp
from jax import lax
from jax.experimental import pallas as pl
from jax.experimental.pallas import tpu as pltpu


def _round_up(x, m):
    return ((x + m - 1) // m) * m


# ----------------------------------------------------------------------------
# VMEM limit: 3/4 of per-core capacity (96 MiB on v5e/v6e, 48 MiB on v7x),
# conservative 48 MiB fallback if the hardware query is unavailable.
# ----------------------------------------------------------------------------
_VMEM_LIMIT_CACHE = [None]


def _vmem_limit_bytes():
    if _VMEM_LIMIT_CACHE[0] is None:
        limit = 48 * 1024 * 1024
        try:
            info = pltpu.get_tpu_info()
            cap = getattr(info, "vmem_capacity_bytes", None)
            if cap:
                limit = (int(cap) * 3) // 4
        except Exception:
            pass
        _VMEM_LIMIT_CACHE[0] = int(limit)
    return _VMEM_LIMIT_CACHE[0]


# ----------------------------------------------------------------------------
# Kernel
# ----------------------------------------------------------------------------
def bert_ffn_kernel(x_ref, mask_ref, w1_ref, b1_ref, w2_ref, b2_ref, o_ref, *,
                    approx_gelu):
    # x_ref: [TM, H] f32, mask_ref: [TM, 1] f32
    # w1_ref: [H, I] bf16, b1_ref: [1, I] f32
    # w2_ref: [I, H] bf16, b2_ref: [1, H] f32
    x = x_ref[...].astype(jnp.bfloat16)          # cheap VALU cast, feeds MXU in bf16

    # dense_input: x @ W1 + b1  (bf16 operands into the MXU, f32 accumulation)
    inter = jnp.dot(x, w1_ref[...], preferred_element_type=jnp.float32)
    inter = inter + b1_ref[...]

    # activation. tanh-approx GELU routes the transcendental to the EUP slot
    # (near-free); exact erf GELU available via approx_gelu=False.
    # The intermediate (row-wise) mask multiply is omitted: the final `* mask`
    # makes it redundant for the module's output.
    if approx_gelu:
        inter = jax.nn.gelu(inter, approximate=True)
    else:
        inter = 0.5 * inter * (1.0 + lax.erf(inter * 0.7071067811865476))

    # dense_output: inter @ W2 + b2
    out = jnp.dot(inter.astype(jnp.bfloat16), w2_ref[...],
                  preferred_element_type=jnp.float32)
    out = out + b2_ref[...]

    # dropout_output (eval): zero padded tokens
    out = out * mask_ref[...]

    o_ref[...] = out.astype(o_ref.dtype)


# ----------------------------------------------------------------------------
# Jitted implementation
# ----------------------------------------------------------------------------
@functools.partial(
    jax.jit,
    static_argnames=("tm", "approx_gelu", "single_buffer_weights", "out_dtype",
                     "vmem_limit"),
)
def _bert_ffn_impl(hidden_states, attention_mask, w1, b1, w2, b2, *,
                   tm, approx_gelu, single_buffer_weights, out_dtype,
                   vmem_limit):
    B, S, H = hidden_states.shape
    I = w1.shape[1]
    M = B * S

    # Row tile: multiple of 16 (bf16 sublane packing), capped by the row count.
    # Note: H and I should ideally be multiples of 128 for full lane/MXU
    # utilization (true for real BERT sizes); block_shape == full dim keeps the
    # toy shapes legal.
    TM = min(_round_up(max(int(tm), 16), 16), _round_up(M, 16))
    n_steps = pl.cdiv(M, TM)
    # Keep >= 2 grid steps when there is enough work (megacore sharding on v7x).
    if n_steps == 1 and M > 16:
        TM = _round_up(pl.cdiv(M, 2), 16)
        n_steps = pl.cdiv(M, TM)
    grid = (n_steps,)

    x2d = hidden_states.reshape(M, H)                       # f32, cast in-kernel
    mask2d = attention_mask.reshape(M, 1).astype(jnp.float32)

    w1b = w1.astype(jnp.bfloat16)                           # no-op if already bf16
    w2b = w2.astype(jnp.bfloat16)
    b1_2d = b1.reshape(1, I).astype(jnp.float32)
    b2_2d = b2.reshape(1, H).astype(jnp.float32)

    def weight_spec(shape):
        # Constant index_map -> fetched once; single-buffer to halve resident
        # weight VMEM (critical for BERT-large on v7x's 64 MiB VMEM).
        if single_buffer_weights:
            return pl.BlockSpec(shape, lambda i: (0, 0),
                                pipeline_mode=pl.Buffered(1))
        return pl.BlockSpec(shape, lambda i: (0, 0))

    grid_spec = pltpu.PrefetchScalarGridSpec(
        num_scalar_prefetch=0,
        grid=grid,
        in_specs=[
            pl.BlockSpec((TM, H), lambda i: (i, 0)),   # x tile     (streams)
            pl.BlockSpec((TM, 1), lambda i: (i, 0)),   # mask tile  (streams)
            weight_spec((H, I)),                       # W1         (resident)
            weight_spec((1, I)),                       # b1         (resident)
            weight_spec((I, H)),                       # W2         (resident)
            weight_spec((1, H)),                       # b2         (resident)
        ],
        out_specs=pl.BlockSpec((TM, H), lambda i: (i, 0)),
    )

    kernel = functools.partial(bert_ffn_kernel, approx_gelu=approx_gelu)

    out2d = pl.pallas_call(
        kernel,
        out_shape=jax.ShapeDtypeStruct((M, H), out_dtype),
        grid_spec=grid_spec,
        compiler_params=pltpu.CompilerParams(
            dimension_semantics=("parallel",),
            vmem_limit_bytes=vmem_limit,
        ),
    )(x2d, mask2d, w1b, b1_2d, w2b, b2_2d)

    return out2d.reshape(B, S, H)


# ----------------------------------------------------------------------------
# Public wrapper (robust fallback if pl.Buffered(1) is unsupported)
# ----------------------------------------------------------------------------
_SINGLE_BUFFER_WEIGHTS_OK = True


def bert_feed_forward(hidden_states, attention_mask, w1, b1, w2, b2, *,
                      tm=512, approx_gelu=True, out_dtype=jnp.float32):
    """hidden_states: [B, S, H], attention_mask: [B, S] (1.0=keep, 0.0=pad).

    w1: [H, I] (bf16 recommended), b1: [I], w2: [I, H] (bf16), b2: [H].
    out_dtype: use jnp.bfloat16 if the downstream residual/LayerNorm accepts it
    (halves output HBM/VMEM traffic).
    """
    global _SINGLE_BUFFER_WEIGHTS_OK
    common = dict(tm=tm, approx_gelu=approx_gelu, out_dtype=out_dtype,
                  vmem_limit=_vmem_limit_bytes())
    if _SINGLE_BUFFER_WEIGHTS_OK:
        try:
            return _bert_ffn_impl(hidden_states, attention_mask, w1, b1, w2, b2,
                                  single_buffer_weights=True, **common)
        except Exception:
            _SINGLE_BUFFER_WEIGHTS_OK = False
    return _bert_ffn_impl(hidden_states, attention_mask, w1, b1, w2, b2,
                          single_buffer_weights=False, **common)


def init_params(key, hidden_size, intermediate_size):
    """nn.Linear-style init: U(-1/sqrt(fan_in), 1/sqrt(fan_in)).

    Weights are stored pre-transposed ([in, out]) and already cast to bf16 so
    the per-call forward does no weight cast (hoisted per perf review)."""
    k1, k2, k3, k4 = jax.random.split(key, 4)
    bound1 = 1.0 / jnp.sqrt(hidden_size)
    bound2 = 1.0 / jnp.sqrt(intermediate_size)
    w1 = jax.random.uniform(k1, (hidden_size, intermediate_size),
                            jnp.float32, -bound1, bound1).astype(jnp.bfloat16)
    b1 = jax.random.uniform(k2, (intermediate_size,), jnp.float32, -bound1, bound1)
    w2 = jax.random.uniform(k3, (intermediate_size, hidden_size),
                            jnp.float32, -bound2, bound2).astype(jnp.bfloat16)
    b2 = jax.random.uniform(k4, (hidden_size,), jnp.float32, -bound2, bound2)
    return w1, b1, w2, b2


if __name__ == "__main__":
    B, S, H = 2, 8, 32
    I = 4 * H  # intermediate_size = 128

    key = jax.random.PRNGKey(0)
    kx, kp = jax.random.split(key)

    hidden_states = jax.random.normal(kx, (B, S, H), dtype=jnp.float32)
    # attention mask: last 2 tokens of each sequence are padding
    attention_mask = jnp.concatenate(
        [jnp.ones((B, S - 2), jnp.float32), jnp.zeros((B, 2), jnp.float32)], axis=1)

    w1, b1, w2, b2 = init_params(kp, H, I)

    out = bert_feed_forward(hidden_states, attention_mask, w1, b1, w2, b2)
    out = jax.block_until_ready(out)

    # Pure-JAX reference with the same bf16-into-MXU / f32-accumulate /
    # tanh-GELU recipe. (tanh-GELU deviates ~1e-3 from exact erf GELU; set
    # approx_gelu=False above for erf semantics.)
    mask = attention_mask[..., None]
    x_bf = hidden_states.astype(jnp.bfloat16)
    inter_ref = jnp.dot(x_bf.reshape(-1, H), w1,
                        preferred_element_type=jnp.float32).reshape(B, S, I) + b1
    inter_ref = jax.nn.gelu(inter_ref, approximate=True)
    out_ref = jnp.dot(inter_ref.astype(jnp.bfloat16).reshape(-1, I), w2,
                      preferred_element_type=jnp.float32).reshape(B, S, H) + b2
    out_ref = out_ref * mask

    assert jnp.allclose(out, out_ref, atol=1e-2, rtol=1e-2), "mismatch vs reference"

    print("KERNEL_OK")
</pallas_src>

<mosaic_0001>
module attributes {stable_mosaic.version = 11 : i64} {
  func.func @bert_ffn_kernel(%arg0: i32, %arg1: memref<16x32xf32, #tpu.memory_space<vmem>>, %arg2: memref<16x1xf32, #tpu.memory_space<vmem>>, %arg3: memref<32x128xbf16, #tpu.memory_space<vmem>>, %arg4: memref<1x128xf32, #tpu.memory_space<vmem>>, %arg5: memref<128x32xbf16, #tpu.memory_space<vmem>>, %arg6: memref<1x32xf32, #tpu.memory_space<vmem>>, %arg7: memref<16x32xf32, #tpu.memory_space<vmem>>) attributes {dimension_semantics = [#tpu.dimension_semantics<parallel>], iteration_bounds = array<i64: 1>, scalar_prefetch = 0 : i64, scratch_operands = 0 : i64, tpu.core_type = #tpu.core_type<tc>, window_params = [{transform_indices = @transform_0, window_bounds = array<i64: 16, 32>}, {transform_indices = @transform_1, window_bounds = array<i64: 16, 1>}, {pipeline_mode = #tpu.pipeline_mode<synchronous>, transform_indices = @transform_2, window_bounds = array<i64: 32, 128>}, {pipeline_mode = #tpu.pipeline_mode<synchronous>, transform_indices = @transform_3, window_bounds = array<i64: 1, 128>}, {pipeline_mode = #tpu.pipeline_mode<synchronous>, transform_indices = @transform_4, window_bounds = array<i64: 128, 32>}, {pipeline_mode = #tpu.pipeline_mode<synchronous>, transform_indices = @transform_5, window_bounds = array<i64: 1, 32>}, {transform_indices = @transform_6, window_bounds = array<i64: 16, 32>}]} {
    %c0 = arith.constant 0 : index
    %c0_0 = arith.constant 0 : index
    %0 = vector.load %arg1[%c0, %c0_0] : memref<16x32xf32, #tpu.memory_space<vmem>>, vector<16x32xf32>
    %1 = arith.truncf %0 : vector<16x32xf32> to vector<16x32xbf16>
    %c0_1 = arith.constant 0 : index
    %c0_2 = arith.constant 0 : index
    %2 = vector.load %arg3[%c0_1, %c0_2] : memref<32x128xbf16, #tpu.memory_space<vmem>>, vector<32x128xbf16>
    %cst = arith.constant dense<0.000000e+00> : vector<16x128xf32>
    %3 = tpu.matmul %1, %2, %cst {dimension_numbers = #tpu.dot_dimension_numbers<[1], [0], [0], [1], [0, 0, 1, 1], [], []>} : vector<16x32xbf16>, vector<32x128xbf16>, vector<16x128xf32> -> vector<16x128xf32>
    %c0_3 = arith.constant 0 : index
    %c0_4 = arith.constant 0 : index
    %4 = vector.load %arg4[%c0_3, %c0_4] : memref<1x128xf32, #tpu.memory_space<vmem>>, vector<1x128xf32>
    %5 = vector.broadcast %4 : vector<1x128xf32> to vector<16x128xf32>
    %6 = arith.addf %3, %5 : vector<16x128xf32>
    %7 = arith.mulf %6, %6 : vector<16x128xf32>
    %8 = arith.mulf %6, %7 : vector<16x128xf32>
    %cst_5 = arith.constant 4.471500e-02 : f32
    %9 = vector.broadcast %cst_5 : f32 to vector<16x128xf32>
    %10 = arith.mulf %9, %8 : vector<16x128xf32>
    %11 = arith.addf %6, %10 : vector<16x128xf32>
    %cst_6 = arith.constant 0.797884583 : f32
    %12 = vector.broadcast %cst_6 : f32 to vector<16x128xf32>
    %13 = arith.mulf %12, %11 : vector<16x128xf32>
    %14 = math.tanh %13 : vector<16x128xf32>
    %cst_7 = arith.constant 1.000000e+00 : f32
    %15 = vector.broadcast %cst_7 : f32 to vector<16x128xf32>
    %16 = arith.addf %15, %14 : vector<16x128xf32>
    %cst_8 = arith.constant 5.000000e-01 : f32
    %17 = vector.broadcast %cst_8 : f32 to vector<16x128xf32>
    %18 = arith.mulf %17, %16 : vector<16x128xf32>
    %19 = arith.mulf %6, %18 : vector<16x128xf32>
    %20 = arith.truncf %19 : vector<16x128xf32> to vector<16x128xbf16>
    %c0_9 = arith.constant 0 : index
    %c0_10 = arith.constant 0 : index
    %21 = vector.load %arg5[%c0_9, %c0_10] : memref<128x32xbf16, #tpu.memory_space<vmem>>, vector<128x32xbf16>
    %cst_11 = arith.constant dense<0.000000e+00> : vector<16x32xf32>
    %22 = tpu.matmul %20, %21, %cst_11 {dimension_numbers = #tpu.dot_dimension_numbers<[1], [0], [0], [1], [0, 0, 1, 1], [], []>} : vector<16x128xbf16>, vector<128x32xbf16>, vector<16x32xf32> -> vector<16x32xf32>
    %c0_12 = arith.constant 0 : index
    %c0_13 = arith.constant 0 : index
    %23 = vector.load %arg6[%c0_12, %c0_13] : memref<1x32xf32, #tpu.memory_space<vmem>>, vector<1x32xf32>
    %24 = vector.broadcast %23 : vector<1x32xf32> to vector<16x32xf32>
    %25 = arith.addf %22, %24 : vector<16x32xf32>
    %c0_14 = arith.constant 0 : index
    %c0_15 = arith.constant 0 : index
    %26 = vector.load %arg2[%c0_14, %c0_15] : memref<16x1xf32, #tpu.memory_space<vmem>>, vector<16x1xf32>
    %27 = vector.broadcast %26 : vector<16x1xf32> to vector<16x32xf32>
    %28 = arith.mulf %25, %27 : vector<16x32xf32>
    %c0_16 = arith.constant 0 : index
    %c0_17 = arith.constant 0 : index
    %29 = vector.load %arg7[%c0_16, %c0_17] : memref<16x32xf32, #tpu.memory_space<vmem>>, vector<16x32xf32>
    tpu.vector_store %arg7[%c0_16, %c0_17], %28 {strides = array<i32>} : memref<16x32xf32, #tpu.memory_space<vmem>>, vector<16x32xf32>,
    return
  }
  func.func @transform_0(%arg0: i32) -> (i32, i32) {
    %c0_i32 = arith.constant 0 : i32
    %c0_i32_0 = arith.constant 0 : i32
    return %arg0, %c0_i32 : i32, i32
  }
  func.func @transform_1(%arg0: i32) -> (i32, i32) {
    %c0_i32 = arith.constant 0 : i32
    %c0_i32_0 = arith.constant 0 : i32
    return %arg0, %c0_i32 : i32, i32
  }
  func.func @transform_2(%arg0: i32) -> (i32, i32) {
    %c0_i32 = arith.constant 0 : i32
    %c0_i32_0 = arith.constant 0 : i32
    %c0_i32_1 = arith.constant 0 : i32
    return %c0_i32, %c0_i32_0 : i32, i32
  }
  func.func @transform_3(%arg0: i32) -> (i32, i32) {
    %c0_i32 = arith.constant 0 : i32
    %c0_i32_0 = arith.constant 0 : i32
    %c0_i32_1 = arith.constant 0 : i32
    return %c0_i32, %c0_i32_0 : i32, i32
  }
  func.func @transform_4(%arg0: i32) -> (i32, i32) {
    %c0_i32 = arith.constant 0 : i32
    %c0_i32_0 = arith.constant 0 : i32
    %c0_i32_1 = arith.constant 0 : i32
    return %c0_i32, %c0_i32_0 : i32, i32
  }
  func.func @transform_5(%arg0: i32) -> (i32, i32) {
    %c0_i32 = arith.constant 0 : i32
    %c0_i32_0 = arith.constant 0 : i32
    %c0_i32_1 = arith.constant 0 : i32
    return %c0_i32, %c0_i32_0 : i32, i32
  }
  func.func @transform_6(%arg0: i32) -> (i32, i32) {
    %c0_i32 = arith.constant 0 : i32
    %c0_i32_0 = arith.constant 0 : i32
    return %arg0, %c0_i32 : i32, i32
  }
}

module attributes {stable_mosaic.version = 11 : i64} {
  func.func @bert_ffn_kernel(%arg0: i32, %arg1: memref<16x32xf32, #tpu.memory_space<vmem>>, %arg2: memref<16x1xf32, #tpu.memory_space<vmem>>, %arg3: memref<32x128xbf16, #tpu.memory_space<vmem>>, %arg4: memref<1x128xf32, #tpu.memory_space<vmem>>, %arg5: memref<128x32xbf16, #tpu.memory_space<vmem>>, %arg6: memref<1x32xf32, #tpu.memory_space<vmem>>, %arg7: memref<16x32xf32, #tpu.memory_space<vmem>>) attributes {dimension_semantics = [#tpu.dimension_semantics<parallel>], iteration_bounds = array<i64: 1>, scalar_prefetch = 0 : i64, scratch_operands = 0 : i64, tpu.core_type = #tpu.core_type<tc>, window_params = [{transform_indices = @transform_0, window_bounds = array<i64: 16, 32>}, {transform_indices = @transform_1, window_bounds = array<i64: 16, 1>}, {pipeline_mode = #tpu.pipeline_mode<synchronous>, transform_indices = @transform_2, window_bounds = array<i64: 32, 128>}, {pipeline_mode = #tpu.pipeline_mode<synchronous>, transform_indices = @transform_3, window_bounds = array<i64: 1, 128>}, {pipeline_mode = #tpu.pipeline_mode<synchronous>, transform_indices = @transform_4, window_bounds = array<i64: 128, 32>}, {pipeline_mode = #tpu.pipeline_mode<synchronous>, transform_indices = @transform_5, window_bounds = array<i64: 1, 32>}, {transform_indices = @transform_6, window_bounds = array<i64: 16, 32>}]} {
    %c0 = arith.constant 0 : index
    %c0_0 = arith.constant 0 : index
    %0 = vector.load %arg1[%c0, %c0_0] : memref<16x32xf32, #tpu.memory_space<vmem>>, vector<16x32xf32>
    %1 = arith.truncf %0 : vector<16x32xf32> to vector<16x32xbf16>
    %c0_1 = arith.constant 0 : index
    %c0_2 = arith.constant 0 : index
    %2 = vector.load %arg3[%c0_1, %c0_2] : memref<32x128xbf16, #tpu.memory_space<vmem>>, vector<32x128xbf16>
    %cst = arith.constant dense<0.000000e+00> : vector<16x128xf32>
    %3 = tpu.matmul %1, %2, %cst {dimension_numbers = #tpu.dot_dimension_numbers<[1], [0], [0], [1], [0, 0, 1, 1], [], []>} : vector<16x32xbf16>, vector<32x128xbf16>, vector<16x128xf32> -> vector<16x128xf32>
    %c0_3 = arith.constant 0 : index
    %c0_4 = arith.constant 0 : index
    %4 = vector.load %arg4[%c0_3, %c0_4] : memref<1x128xf32, #tpu.memory_space<vmem>>, vector<1x128xf32>
    %5 = vector.broadcast %4 : vector<1x128xf32> to vector<16x128xf32>
    %6 = arith.addf %3, %5 : vector<16x128xf32>
    %7 = arith.mulf %6, %6 : vector<16x128xf32>
    %8 = arith.mulf %6, %7 : vector<16x128xf32>
    %cst_5 = arith.constant 4.471500e-02 : f32
    %9 = vector.broadcast %cst_5 : f32 to vector<16x128xf32>
    %10 = arith.mulf %9, %8 : vector<16x128xf32>
    %11 = arith.addf %6, %10 : vector<16x128xf32>
    %cst_6 = arith.constant 0.797884583 : f32
    %12 = vector.broadcast %cst_6 : f32 to vector<16x128xf32>
    %13 = arith.mulf %12, %11 : vector<16x128xf32>
    %14 = math.tanh %13 : vector<16x128xf32>
    %cst_7 = arith.constant 1.000000e+00 : f32
    %15 = vector.broadcast %cst_7 : f32 to vector<16x128xf32>
    %16 = arith.addf %15, %14 : vector<16x128xf32>
    %cst_8 = arith.constant 5.000000e-01 : f32
    %17 = vector.broadcast %cst_8 : f32 to vector<16x128xf32>
    %18 = arith.mulf %17, %16 : vector<16x128xf32>
    %19 = arith.mulf %6, %18 : vector<16x128xf32>
    %20 = arith.truncf %19 : vector<16x128xf32> to vector<16x128xbf16>
    %c0_9 = arith.constant 0 : index
    %c0_10 = arith.constant 0 : index
    %21 = vector.load %arg5[%c0_9, %c0_10] : memref<128x32xbf16, #tpu.memory_space<vmem>>, vector<128x32xbf16>
    %cst_11 = arith.constant dense<0.000000e+00> : vector<16x32xf32>
    %22 = tpu.matmul %20, %21, %cst_11 {dimension_numbers = #tpu.dot_dimension_numbers<[1], [0], [0], [1], [0, 0, 1, 1], [], []>} : vector<16x128xbf16>, vector<128x32xbf16>, vector<16x32xf32> -> vector<16x32xf32>
    %c0_12 = arith.constant 0 : index
    %c0_13 = arith.constant 0 : index
    %23 = vector.load %arg6[%c0_12, %c0_13] : memref<1x32xf32, #tpu.memory_space<vmem>>, vector<1x32xf32>
    %24 = vector.broadcast %23 : vector<1x32xf32> to vector<16x32xf32>
    %25 = arith.addf %22, %24 : vector<16x32xf32>
    %c0_14 = arith.constant 0 : index
    %c0_15 = arith.constant 0 : index
    %26 = vector.load %arg2[%c0_14, %c0_15] : memref<16x1xf32, #tpu.memory_space<vmem>>, vector<16x1xf32>
    %27 = vector.broadcast %26 : vector<16x1xf32> to vector<16x32xf32>
    %28 = arith.mulf %25, %27 : vector<16x32xf32>
    %c0_16 = arith.constant 0 : index
    %c0_17 = arith.constant 0 : index
    %29 = vector.load %arg7[%c0_16, %c0_17] : memref<16x32xf32, #tpu.memory_space<vmem>>, vector<16x32xf32>
    tpu.vector_store %arg7[%c0_16, %c0_17], %28 {strides = array<i32>} : memref<16x32xf32, #tpu.memory_space<vmem>>, vector<16x32xf32>,
    return
  }
  func.func @transform_0(%arg0: i32) -> (i32, i32) {
    %c0_i32 = arith.constant 0 : i32
    %c0_i32_0 = arith.constant 0 : i32
    return %arg0, %c0_i32 : i32, i32
  }
  func.func @transform_1(%arg0: i32) -> (i32, i32) {
    %c0_i32 = arith.constant 0 : i32
    %c0_i32_0 = arith.constant 0 : i32
    return %arg0, %c0_i32 : i32, i32
  }
  func.func @transform_2(%arg0: i32) -> (i32, i32) {
    %c0_i32 = arith.constant 0 : i32
    %c0_i32_0 = arith.constant 0 : i32
    %c0_i32_1 = arith.constant 0 : i32
    return %c0_i32, %c0_i32_0 : i32, i32
  }
  func.func @transform_3(%arg0: i32) -> (i32, i32) {
    %c0_i32 = arith.constant 0 : i32
    %c0_i32_0 = arith.constant 0 : i32
    %c0_i32_1 = arith.constant 0 : i32
    return %c0_i32, %c0_i32_0 : i32, i32
  }
  func.func @transform_4(%arg0: i32) -> (i32, i32) {
    %c0_i32 = arith.constant 0 : i32
    %c0_i32_0 = arith.constant 0 : i32
    %c0_i32_1 = arith.constant 0 : i32
    return %c0_i32, %c0_i32_0 : i32, i32
  }
  func.func @transform_5(%arg0: i32) -> (i32, i32) {
    %c0_i32 = arith.constant 0 : i32
    %c0_i32_0 = arith.constant 0 : i32
    %c0_i32_1 = arith.constant 0 : i32
    return %c0_i32, %c0_i32_0 : i32, i32
  }
  func.func @transform_6(%arg0: i32) -> (i32, i32) {
    %c0_i32 = arith.constant 0 : i32
    %c0_i32_0 = arith.constant 0 : i32
    return %arg0, %c0_i32 : i32, i32
  }
}

</mosaic_0001>

<llo_original>
// kernel: _bert_ffn_impl.1
$region0: #{_bert_ffn_impl.1}
  #allocation0 [shape = 'u32[]', space=smem, size = 0x4, offset = 0x4, fixed_abs, tag = 'smem constant byte address 0x4 - core index']
  #allocation1 [shape = 'u32[144,128]{1,0:T(1,128)}', space=vmem, size = 0x12000, scoped, tag = 'internal scratch']
  %s0 = inlined_call_operand.vmem [shape: f32[16,32], index: 0, kind: input, shape index: {}]
  %s1 = inlined_call_operand.vmem [shape: f32[16,1], index: 1, kind: input, shape index: {}]
  %s2 = inlined_call_operand.vmem [shape: bf16[32,128], index: 2, kind: input, shape index: {}]
  %s3 = inlined_call_operand.vmem [shape: f32[1,128], index: 3, kind: input, shape index: {}]
  %s4 = inlined_call_operand.vmem [shape: bf16[128,32], index: 4, kind: input, shape index: {}]
  %s5 = inlined_call_operand.vmem [shape: f32[1,32], index: 5, kind: input, shape index: {}]
  %s6 = inlined_call_operand.hbm [shape: f32[16,32], index: 6, kind: output, shape index: {}]
  %s7 = sld [smem:[#allocation0]]
  $region34: #{_bert_ffn_impl.1} parent=0
    _
  %s9 = ssub.s32 1, %s7
  %s10 = scalar_select 0, %s9, %s7
  $region1: #{_bert_ffn_impl.1} parent=0
    #allocation2 [shape = 'u8[8192]{0}', space=vmem, size = 0x2000, scoped, tag = 'output window, operand 0, single buffered']
    #allocation3 [shape = 's32[1]{0}', space=sflag, size = 0x4, scoped, tag = 'scoped memory for _bert_ffn_impl.1']
    %11 = vsyncpa [#allocation3], 0
    // Predicated region
    $region2: #{_bert_ffn_impl.1} parent=1 // pred_check
      _
    $region3: #{_bert_ffn_impl.1} parent=1 // pred_check_branch
      %13 = sbr.rel (0) target = $region5
    $region4: #{_bert_ffn_impl.1} parent=1 // pred_region
      _
    $region5: #{_bert_ffn_impl.1} parent=1 // pred_fallthru
      _
    // Predicated region
    $region6: #{_bert_ffn_impl.1} parent=1 // pred_check
      _
    $region7: #{_bert_ffn_impl.1} parent=1 // pred_check_branch
      %15 = sbr.rel (0) target = $region9
    $region8: #{_bert_ffn_impl.1} parent=1 // pred_region
      _
    $region9: #{_bert_ffn_impl.1} parent=1 // pred_fallthru
      _
    // Predicated region
    $region10: #{_bert_ffn_impl.1} parent=1 // pred_check
      _
    $region11: #{_bert_ffn_impl.1} parent=1 // pred_check_branch
      %17 = sbr.rel (0) target = $region13
    $region12: #{_bert_ffn_impl.1} parent=1 // pred_region
      _
    $region13: #{_bert_ffn_impl.1} parent=1 // pred_fallthru
      _
    // Predicated region
    $region14: #{_bert_ffn_impl.1} parent=1 // pred_check
      _
    $region15: #{_bert_ffn_impl.1} parent=1 // pred_check_branch
      %19 = sbr.rel (0) target = $region17
    $region16: #{_bert_ffn_impl.1} parent=1 // pred_region
      _
    $region17: #{_bert_ffn_impl.1} parent=1 // pred_fallthru
      _
    // Predicated region
    $region18: #{_bert_ffn_impl.1} parent=1 // pred_check
      _
    $region19: #{_bert_ffn_impl.1} parent=1 // pred_check_branch
      %21 = sbr.rel (0) target = $region21
    $region20: #{_bert_ffn_impl.1} parent=1 // pred_region
      _
    $region21: #{_bert_ffn_impl.1} parent=1 // pred_fallthru
      _
    // Predicated region
    $region22: #{_bert_ffn_impl.1} parent=1 // pred_check
      _
    $region23: #{_bert_ffn_impl.1} parent=1 // pred_check_branch
      %23 = sbr.rel (0) target = $region25
    $region24: #{_bert_ffn_impl.1} parent=1 // pred_region
      _
    $region25: #{_bert_ffn_impl.1} parent=1 // pred_fallthru
      _
    %v25 = vld [vmem:[%s0] sm:$0xff]
    %v26 = vld [vmem:[%s0 + $0x8] sm:$0xff]
    %v27 = vpack.c.bf16 %v26, %v25
    %v28 = vld [vmem:[%s2] sm:$0xf]
    %v29 = vld [vmem:[%s2 + $0x4] sm:$0xf]
    %v30 = vld [vmem:[%s2 + $0x8] sm:$0xf]
    %v31 = vld [vmem:[%s2 + $0xc] sm:$0xf]
    %v32 = vld [vmem:[%s3] sm:$0x1]
    %v34 = vlaneseq
    %v35 = vshrl.u32 %v34, 7
    %v36 = vsub.s32 0, %v35
    %v37 = vrot.slane %v32, %v36
    %v43 = vunpack.c.l.b16 %v28
    %v44 = vunpack.c.l.b16 %v29
    %v45 = vunpack.c.l.b16 %v30
    %v46 = vunpack.c.l.b16 %v31
    %v47 = vpack.c.b16 %v44, %v43
    %v48 = vpack.c.b16 %v46, %v45
    %vm51 = vcmask 261120
    %v53 = vsel %vm51, %v27, 0
    %55 = vmatprep.subr.bf16.mxu0 0
    %56 = vmatpush1.bf16.msra.mxu0 %v47
    %57 = vmatprep.subr.bf16.mxu0 0
    %58 = vmatpush1.bf16.msra.mxu0 %v48
    %59 = vmatprep.subr.bf16.mxu0 0
    %60 = vmatpush1.bf16.msra.mxu0 0
    %61 = vmatprep.subr.bf16.mxu0 0
    %62 = vmatpush1.bf16.msra.mxu0 0
    %63 = vmatprep.subr.bf16.mxu0 0
    %64 = vmatpush1.bf16.msra.mxu0 0
    %65 = vmatprep.subr.bf16.mxu0 0
    %66 = vmatpush1.bf16.msra.mxu0 0
    %67 = vmatprep.subr.bf16.mxu0 0
    %68 = vmatpush1.bf16.msra.mxu0 0
    %69 = vmatprep.subr.bf16.mxu0 0
    %70 = vmatpush1.bf16.msra.mxu0 0
    %71 = vmatprep.subr.bf16.mxu0 0
    %72 = vmatpush1.bf16.msra.mxu0 0
    %73 = vmatprep.subr.bf16.mxu0 0
    %74 = vmatpush1.bf16.msra.mxu0 0
    %75 = vmatprep.subr.bf16.mxu0 0
    %76 = vmatpush1.bf16.msra.mxu0 0
    %77 = vmatprep.subr.bf16.mxu0 0
    %78 = vmatpush1.bf16.msra.mxu0 0
    %79 = vmatprep.subr.bf16.mxu0 0
    %80 = vmatpush1.bf16.msra.mxu0 0
    %81 = vmatprep.subr.bf16.mxu0 0
    %82 = vmatpush1.bf16.msra.mxu0 0
    %83 = vmatprep.subr.bf16.mxu0 0
    %84 = vmatpush1.bf16.msra.mxu0 0
    %85 = vmatprep.subr.bf16.mxu0 0
    %86 = vmatpush1.bf16.msra.mxu0 0
    %87 = vmatprep.mubr.bf16.mxu0 0
    %88 = vmatmul.mubr.bf16.gmra.mrb[0].mxu0 %v53
    %v89 = vpop.f32.mrb[0].mxu0
    %v90 = vadd.f32 %v37, %v89
    %v91 = vpop.f32.mrb[0].mxu0
    %v92 = vpop.f32.mrb[0].mxu0
    %v93 = vadd.f32 %v37, %v92
    %v94 = vpop.f32.mrb[0].mxu0
    %95 = vdwg.mxu0
    %v96 = vmul.f32 %v90, %v90
    %v97 = vmul.f32 %v93, %v93
    %v98 = vmul.f32 %v90, %v96
    %v99 = vmul.f32 %v93, %v97
    %v100 = vmul.f32 %v98, 0.044715
    %v101 = vmul.f32 %v99, 0.044715
    %v102 = vadd.f32 %v90, %v100
    %v103 = vadd.f32 %v93, %v101
    %v104 = vmul.f32 %v102, 0.7978846
    %v105 = vmul.f32 %v103, 0.7978846
    %v106 = vtanh.pop %v104
    %v107 = vtanh.pop %v105
    %v108 = vadd.f32 %v106, 1.0
    %v109 = vadd.f32 %v107, 1.0
    %v110 = vmul.f32 %v108, 0.5
    %v111 = vmul.f32 %v109, 0.5
    %v112 = vmul.f32 %v90, %v110
    %v113 = vmul.f32 %v93, %v111
    %v114 = vpack.c.bf16 %v113, %v112
    %v115 = vld [vmem:[%s4] sm:$0xf]
    %v116 = vld [vmem:[%s4 + $0x4] sm:$0xf]
    %v117 = vld [vmem:[%s4 + $0x8] sm:$0xf]
    %v118 = vld [vmem:[%s4 + $0xc] sm:$0xf]
    %v119 = vld [vmem:[%s4 + $0x10] sm:$0xf]
    %v120 = vld [vmem:[%s4 + $0x14] sm:$0xf]
    %v121 = vld [vmem:[%s4 + $0x18] sm:$0xf]
    %v122 = vld [vmem:[%s4 + $0x1c] sm:$0xf]
    %v123 = vld [vmem:[%s4 + $0x20] sm:$0xf]
    %v124 = vld [vmem:[%s4 + $0x24] sm:$0xf]
    %v125 = vld [vmem:[%s4 + $0x28] sm:$0xf]
    %v126 = vld [vmem:[%s4 + $0x2c] sm:$0xf]
    %v127 = vld [vmem:[%s4 + $0x30] sm:$0xf]
    %v128 = vld [vmem:[%s4 + $0x34] sm:$0xf]
    %v129 = vld [vmem:[%s4 + $0x38] sm:$0xf]
    %v130 = vld [vmem:[%s4 + $0x3c] sm:$0xf]
    %v131 = vld [vmem:[%s5] sm:$0x1]
    %v133 = vlaneseq
    %v134 = vshrl.u32 %v133, 7
    %v135 = vsub.s32 0, %v134
    %v136 = vrot.slane %v131, %v135
    %v154 = vunpack.c.l.b16 %v115
    %v155 = vunpack.c.l.b16 %v116
    %v156 = vunpack.c.l.b16 %v117
    %v157 = vunpack.c.l.b16 %v118
    %v158 = vunpack.c.l.b16 %v119
    %v159 = vunpack.c.l.b16 %v120
    %v160 = vunpack.c.l.b16 %v121
    %v161 = vunpack.c.l.b16 %v122
    %v162 = vunpack.c.l.b16 %v123
    %v163 = vunpack.c.l.b16 %v124
    %v164 = vunpack.c.l.b16 %v125
    %v165 = vunpack.c.l.b16 %v126
    %v166 = vunpack.c.l.b16 %v127
    %v167 = vunpack.c.l.b16 %v128
    %v168 = vunpack.c.l.b16 %v129
    %v169 = vunpack.c.l.b16 %v130
    %v170 = vpack.c.b16 %v155, %v154
    %v171 = vpack.c.b16 %v157, %v156
    %v172 = vpack.c.b16 %v159, %v158
    %v173 = vpack.c.b16 %v161, %v160
    %v174 = vpack.c.b16 %v163, %v162
    %v175 = vpack.c.b16 %v165, %v164
    %v176 = vpack.c.b16 %v167, %v166
    %v177 = vpack.c.b16 %v169, %v168
    %186 = vmatprep.subr.bf16.mxu0 0
    %187 = vmatpush1.bf16.msra.mxu0 %v170
    %188 = vmatprep.subr.bf16.mxu0 0
    %189 = vmatpush1.bf16.msra.mxu0 %v171
    %190 = vmatprep.subr.bf16.mxu0 0
    %191 = vmatpush1.bf16.msra.mxu0 %v172
    %192 = vmatprep.subr.bf16.mxu0 0
    %193 = vmatpush1.bf16.msra.mxu0 %v173
    %194 = vmatprep.subr.bf16.mxu0 0
    %195 = vmatpush1.bf16.msra.mxu0 %v174
    %196 = vmatprep.subr.bf16.mxu0 0
    %197 = vmatpush1.bf16.msra.mxu0 %v175
    %198 = vmatprep.subr.bf16.mxu0 0
    %199 = vmatpush1.bf16.msra.mxu0 %v176
    %200 = vmatprep.subr.bf16.mxu0 0
    %201 = vmatpush1.bf16.msra.mxu0 %v177
    %202 = vmatprep.subr.bf16.mxu0 0
    %203 = vmatpush1.bf16.msra.mxu0 0
    %204 = vmatprep.subr.bf16.mxu0 0
    %205 = vmatpush1.bf16.msra.mxu0 0
    %206 = vmatprep.subr.bf16.mxu0 0
    %207 = vmatpush1.bf16.msra.mxu0 0
    %208 = vmatprep.subr.bf16.mxu0 0
    %209 = vmatpush1.bf16.msra.mxu0 0
    %210 = vmatprep.subr.bf16.mxu0 0
    %211 = vmatpush1.bf16.msra.mxu0 0
    %212 = vmatprep.subr.bf16.mxu0 0
    %213 = vmatpush1.bf16.msra.mxu0 0
    %214 = vmatprep.subr.bf16.mxu0 0
    %215 = vmatpush1.bf16.msra.mxu0 0
    %216 = vmatprep.subr.bf16.mxu0 0
    %217 = vmatpush1.bf16.msra.mxu0 0
    %218 = vmatprep.mubr.bf16.mxu0 0
    %219 = vmatmul.mubr.bf16.gmra.mrb[0].mxu0 %v114
    %v220 = vpop.f32.mrb[0].mxu0
    %v221 = vadd.f32 %v136, %v220
    %v222 = vpop.f32.mrb[0].mxu0
    %v223 = vpop.f32.mrb[0].mxu0
    %v224 = vadd.f32 %v136, %v223
    %v225 = vpop.f32.mrb[0].mxu0
    %226 = vdwg.mxu0
    %v227 = vld [vmem:[%s1] sm:$0xff]
    %v228 = vld [vmem:[%s1 + $0x8] sm:$0xff]
    %230 = vset.pattern.permute.xlu0 0
    %231 = vperm.xlu0 %230, %v227
    %v232 = vpop.permute.xlu0 %231
    %235 = vset.pattern.permute.xlu0 0
    %236 = vperm.xlu0 %235, %v228
    %v237 = vpop.permute.xlu0 %236
    %v239 = vmul.f32 %v221, %v232
    %v240 = vmul.f32 %v224, %v237
    %241 = vst.msk [vmem:[#allocation2] sm:$0xff] %vm51, %v239
    %242 = vst.msk [vmem:[#allocation2 + $0x8] sm:$0xff] %vm51, %v240
    // Predicated region
    $region26: #{_bert_ffn_impl.1} parent=1 // pred_check
      _
    $region27: #{_bert_ffn_impl.1} parent=1 // pred_check_branch
      %244 = sbr.rel (0) target = $region29
    $region28: #{_bert_ffn_impl.1} parent=1 // pred_region
      %s246 = ssub.s32 256, 256
      %247 = vsyncadd [#allocation3], %s246
      %s248 = sshll.u32 [#allocation2], 4
      %s249 = int_to_ptr.vmem [resolvable:$true] %s248
      %254 = dma.vmem_to_hbm [thread:$0]  %s249, 256, %s6, [#allocation3], 128, 128, 8
    $region29: #{_bert_ffn_impl.1} parent=1 // pred_fallthru
      _
    // Predicated region
    $region30: #{_bert_ffn_impl.1} parent=1 // pred_check
      _
    $region31: #{_bert_ffn_impl.1} parent=1 // pred_check_branch
      %256 = sbr.rel (0) target = $region33
    $region32: #{_bert_ffn_impl.1} parent=1 // pred_region
      %257 = dma.done [#allocation3], 256
    $region33: #{_bert_ffn_impl.1} parent=1 // pred_fallthru
      _
    %258 = vsyncpa [#allocation3], 1

// kernel: _bert_ffn_impl.1
$region0: #{_bert_ffn_impl.1}
  #allocation0 [shape = 'u32[]', space=smem, size = 0x4, offset = 0x4, fixed_abs, tag = 'smem constant byte address 0x4 - core index']
  #allocation1 [shape = 'u32[144,128]{1,0:T(1,128)}', space=vmem, size = 0x12000, scoped, tag = 'internal scratch']
  %s0 = inlined_call_operand.vmem [shape: f32[16,32], index: 0, kind: input, shape index: {}]
  %s1 = inlined_call_operand.vmem [shape: f32[16,1], index: 1, kind: input, shape index: {}]
  %s2 = inlined_call_operand.vmem [shape: bf16[32,128], index: 2, kind: input, shape index: {}]
  %s3 = inlined_call_operand.vmem [shape: f32[1,128], index: 3, kind: input, shape index: {}]
  %s4 = inlined_call_operand.vmem [shape: bf16[128,32], index: 4, kind: input, shape index: {}]
  %s5 = inlined_call_operand.vmem [shape: f32[1,32], index: 5, kind: input, shape index: {}]
  %s6 = inlined_call_operand.hbm [shape: f32[16,32], index: 6, kind: output, shape index: {}]
  %s7 = sld [smem:[#allocation0]]
  $region34: #{_bert_ffn_impl.1} parent=0
    _
  %s9 = ssub.s32 1, %s7
  %s10 = scalar_select 0, %s9, %s7
  $region1: #{_bert_ffn_impl.1} parent=0
    #allocation2 [shape = 'u8[8192]{0}', space=vmem, size = 0x2000, scoped, tag = 'output window, operand 0, single buffered']
    #allocation3 [shape = 's32[1]{0}', space=sflag, size = 0x4, scoped, tag = 'scoped memory for _bert_ffn_impl.1']
    %11 = vsyncpa [#allocation3], 0
    // Predicated region
    $region2: #{_bert_ffn_impl.1} parent=1 // pred_check
      _
    $region3: #{_bert_ffn_impl.1} parent=1 // pred_check_branch
      %13 = sbr.rel (0) target = $region5
    $region4: #{_bert_ffn_impl.1} parent=1 // pred_region
      _
    $region5: #{_bert_ffn_impl.1} parent=1 // pred_fallthru
      _
    // Predicated region
    $region6: #{_bert_ffn_impl.1} parent=1 // pred_check
      _
    $region7: #{_bert_ffn_impl.1} parent=1 // pred_check_branch
      %15 = sbr.rel (0) target = $region9
    $region8: #{_bert_ffn_impl.1} parent=1 // pred_region
      _
    $region9: #{_bert_ffn_impl.1} parent=1 // pred_fallthru
      _
    // Predicated region
    $region10: #{_bert_ffn_impl.1} parent=1 // pred_check
      _
    $region11: #{_bert_ffn_impl.1} parent=1 // pred_check_branch
      %17 = sbr.rel (0) target = $region13
    $region12: #{_bert_ffn_impl.1} parent=1 // pred_region
      _
    $region13: #{_bert_ffn_impl.1} parent=1 // pred_fallthru
      _
    // Predicated region
    $region14: #{_bert_ffn_impl.1} parent=1 // pred_check
      _
    $region15: #{_bert_ffn_impl.1} parent=1 // pred_check_branch
      %19 = sbr.rel (0) target = $region17
    $region16: #{_bert_ffn_impl.1} parent=1 // pred_region
      _
    $region17: #{_bert_ffn_impl.1} parent=1 // pred_fallthru
      _
    // Predicated region
    $region18: #{_bert_ffn_impl.1} parent=1 // pred_check
      _
    $region19: #{_bert_ffn_impl.1} parent=1 // pred_check_branch
      %21 = sbr.rel (0) target = $region21
    $region20: #{_bert_ffn_impl.1} parent=1 // pred_region
      _
    $region21: #{_bert_ffn_impl.1} parent=1 // pred_fallthru
      _
    // Predicated region
    $region22: #{_bert_ffn_impl.1} parent=1 // pred_check
      _
    $region23: #{_bert_ffn_impl.1} parent=1 // pred_check_branch
      %23 = sbr.rel (0) target = $region25
    $region24: #{_bert_ffn_impl.1} parent=1 // pred_region
      _
    $region25: #{_bert_ffn_impl.1} parent=1 // pred_fallthru
      _
    %v25 = vld [vmem:[%s0] sm:$0xff]
    %v26 = vld [vmem:[%s0 + $0x8] sm:$0xff]
    %v27 = vpack.c.bf16 %v26, %v25
    %v28 = vld [vmem:[%s2] sm:$0xf]
    %v29 = vld [vmem:[%s2 + $0x4] sm:$0xf]
    %v30 = vld [vmem:[%s2 + $0x8] sm:$0xf]
    %v31 = vld [vmem:[%s2 + $0xc] sm:$0xf]
    %v32 = vld [vmem:[%s3] sm:$0x1]
    %v34 = vlaneseq
    %v35 = vshrl.u32 %v34, 7
    %v36 = vsub.s32 0, %v35
    %v37 = vrot.slane %v32, %v36
    %v43 = vunpack.c.l.b16 %v28
    %v44 = vunpack.c.l.b16 %v29
    %v45 = vunpack.c.l.b16 %v30
    %v46 = vunpack.c.l.b16 %v31
    %v47 = vpack.c.b16 %v44, %v43
    %v48 = vpack.c.b16 %v46, %v45
    %vm51 = vcmask 261120
    %v53 = vsel %vm51, %v27, 0
    %55 = vmatprep.subr.bf16.mxu0 0
    %56 = vmatpush1.bf16.msra.mxu0 %v47
    %57 = vmatprep.subr.bf16.mxu0 0
    %58 = vmatpush1.bf16.msra.mxu0 %v48
    %59 = vmatprep.subr.bf16.mxu0 0
    %60 = vmatpush1.bf16.msra.mxu0 0
    %61 = vmatprep.subr.bf16.mxu0 0
    %62 = vmatpush1.bf16.msra.mxu0 0
    %63 = vmatprep.subr.bf16.mxu0 0
    %64 = vmatpush1.bf16.msra.mxu0 0
    %65 = vmatprep.subr.bf16.mxu0 0
    %66 = vmatpush1.bf16.msra.mxu0 0
    %67 = vmatprep.subr.bf16.mxu0 0
    %68 = vmatpush1.bf16.msra.mxu0 0
    %69 = vmatprep.subr.bf16.mxu0 0
    %70 = vmatpush1.bf16.msra.mxu0 0
    %71 = vmatprep.subr.bf16.mxu0 0
    %72 = vmatpush1.bf16.msra.mxu0 0
    %73 = vmatprep.subr.bf16.mxu0 0
    %74 = vmatpush1.bf16.msra.mxu0 0
    %75 = vmatprep.subr.bf16.mxu0 0
    %76 = vmatpush1.bf16.msra.mxu0 0
    %77 = vmatprep.subr.bf16.mxu0 0
    %78 = vmatpush1.bf16.msra.mxu0 0
    %79 = vmatprep.subr.bf16.mxu0 0
    %80 = vmatpush1.bf16.msra.mxu0 0
    %81 = vmatprep.subr.bf16.mxu0 0
    %82 = vmatpush1.bf16.msra.mxu0 0
    %83 = vmatprep.subr.bf16.mxu0 0
    %84 = vmatpush1.bf16.msra.mxu0 0
    %85 = vmatprep.subr.bf16.mxu0 0
    %86 = vmatpush1.bf16.msra.mxu0 0
    %87 = vmatprep.mubr.bf16.mxu0 0
    %88 = vmatmul.mubr.bf16.gmra.mrb[0].mxu0 %v53
    %v89 = vpop.f32.mrb[0].mxu0
    %v90 = vadd.f32 %v37, %v89
    %v91 = vpop.f32.mrb[0].mxu0
    %v92 = vpop.f32.mrb[0].mxu0
    %v93 = vadd.f32 %v37, %v92
    %v94 = vpop.f32.mrb[0].mxu0
    %95 = vdwg.mxu0
    %v96 = vmul.f32 %v90, %v90
    %v97 = vmul.f32 %v93, %v93
    %v98 = vmul.f32 %v90, %v96
    %v99 = vmul.f32 %v93, %v97
    %v100 = vmul.f32 %v98, 0.044715
    %v101 = vmul.f32 %v99, 0.044715
    %v102 = vadd.f32 %v90, %v100
    %v103 = vadd.f32 %v93, %v101
    %v104 = vmul.f32 %v102, 0.7978846
    %v105 = vmul.f32 %v103, 0.7978846
    %v106 = vtanh.pop %v104
    %v107 = vtanh.pop %v105
    %v108 = vadd.f32 %v106, 1.0
    %v109 = vadd.f32 %v107, 1.0
    %v110 = vmul.f32 %v108, 0.5
    %v111 = vmul.f32 %v109, 0.5
    %v112 = vmul.f32 %v90, %v110
    %v113 = vmul.f32 %v93, %v111
    %v114 = vpack.c.bf16 %v113, %v112
    %v115 = vld [vmem:[%s4] sm:$0xf]
    %v116 = vld [vmem:[%s4 + $0x4] sm:$0xf]
    %v117 = vld [vmem:[%s4 + $0x8] sm:$0xf]
    %v118 = vld [vmem:[%s4 + $0xc] sm:$0xf]
    %v119 = vld [vmem:[%s4 + $0x10] sm:$0xf]
    %v120 = vld [vmem:[%s4 + $0x14] sm:$0xf]
    %v121 = vld [vmem:[%s4 + $0x18] sm:$0xf]
    %v122 = vld [vmem:[%s4 + $0x1c] sm:$0xf]
    %v123 = vld [vmem:[%s4 + $0x20] sm:$0xf]
    %v124 = vld [vmem:[%s4 + $0x24] sm:$0xf]
    %v125 = vld [vmem:[%s4 + $0x28] sm:$0xf]
    %v126 = vld [vmem:[%s4 + $0x2c] sm:$0xf]
    %v127 = vld [vmem:[%s4 + $0x30] sm:$0xf]
    %v128 = vld [vmem:[%s4 + $0x34] sm:$0xf]
    %v129 = vld [vmem:[%s4 + $0x38] sm:$0xf]
    %v130 = vld [vmem:[%s4 + $0x3c] sm:$0xf]
    %v131 = vld [vmem:[%s5] sm:$0x1]
    %v133 = vlaneseq
    %v134 = vshrl.u32 %v133, 7
    %v135 = vsub.s32 0, %v134
    %v136 = vrot.slane %v131, %v135
    %v154 = vunpack.c.l.b16 %v115
    %v155 = vunpack.c.l.b16 %v116
    %v156 = vunpack.c.l.b16 %v117
    %v157 = vunpack.c.l.b16 %v118
    %v158 = vunpack.c.l.b16 %v119
    %v159 = vunpack.c.l.b16 %v120
    %v160 = vunpack.c.l.b16 %v121
    %v161 = vunpack.c.l.b16 %v122
    %v162 = vunpack.c.l.b16 %v123
    %v163 = vunpack.c.l.b16 %v124
    %v164 = vunpack.c.l.b16 %v125
    %v165 = vunpack.c.l.b16 %v126
    %v166 = vunpack.c.l.b16 %v127
    %v167 = vunpack.c.l.b16 %v128
    %v168 = vunpack.c.l.b16 %v129
    %v169 = vunpack.c.l.b16 %v130
    %v170 = vpack.c.b16 %v155, %v154
    %v171 = vpack.c.b16 %v157, %v156
    %v172 = vpack.c.b16 %v159, %v158
    %v173 = vpack.c.b16 %v161, %v160
    %v174 = vpack.c.b16 %v163, %v162
    %v175 = vpack.c.b16 %v165, %v164
    %v176 = vpack.c.b16 %v167, %v166
    %v177 = vpack.c.b16 %v169, %v168
    %186 = vmatprep.subr.bf16.mxu0 0
    %187 = vmatpush1.bf16.msra.mxu0 %v170
    %188 = vmatprep.subr.bf16.mxu0 0
    %189 = vmatpush1.bf16.msra.mxu0 %v171
    %190 = vmatprep.subr.bf16.mxu0 0
    %191 = vmatpush1.bf16.msra.mxu0 %v172
    %192 = vmatprep.subr.bf16.mxu0 0
    %193 = vmatpush1.bf16.msra.mxu0 %v173
    %194 = vmatprep.subr.bf16.mxu0 0
    %195 = vmatpush1.bf16.msra.mxu0 %v174
    %196 = vmatprep.subr.bf16.mxu0 0
    %197 = vmatpush1.bf16.msra.mxu0 %v175
    %198 = vmatprep.subr.bf16.mxu0 0
    %199 = vmatpush1.bf16.msra.mxu0 %v176
    %200 = vmatprep.subr.bf16.mxu0 0
    %201 = vmatpush1.bf16.msra.mxu0 %v177
    %202 = vmatprep.subr.bf16.mxu0 0
    %203 = vmatpush1.bf16.msra.mxu0 0
    %204 = vmatprep.subr.bf16.mxu0 0
    %205 = vmatpush1.bf16.msra.mxu0 0
    %206 = vmatprep.subr.bf16.mxu0 0
    %207 = vmatpush1.bf16.msra.mxu0 0
    %208 = vmatprep.subr.bf16.mxu0 0
    %209 = vmatpush1.bf16.msra.mxu0 0
    %210 = vmatprep.subr.bf16.mxu0 0
    %211 = vmatpush1.bf16.msra.mxu0 0
    %212 = vmatprep.subr.bf16.mxu0 0
    %213 = vmatpush1.bf16.msra.mxu0 0
    %214 = vmatprep.subr.bf16.mxu0 0
    %215 = vmatpush1.bf16.msra.mxu0 0
    %216 = vmatprep.subr.bf16.mxu0 0
    %217 = vmatpush1.bf16.msra.mxu0 0
    %218 = vmatprep.mubr.bf16.mxu0 0
    %219 = vmatmul.mubr.bf16.gmra.mrb[0].mxu0 %v114
    %v220 = vpop.f32.mrb[0].mxu0
    %v221 = vadd.f32 %v136, %v220
    %v222 = vpop.f32.mrb[0].mxu0
    %v223 = vpop.f32.mrb[0].mxu0
    %v224 = vadd.f32 %v136, %v223
    %v225 = vpop.f32.mrb[0].mxu0
    %226 = vdwg.mxu0
    %v227 = vld [vmem:[%s1] sm:$0xff]
    %v228 = vld [vmem:[%s1 + $0x8] sm:$0xff]
    %230 = vset.pattern.permute.xlu0 0
    %231 = vperm.xlu0 %230, %v227
    %v232 = vpop.permute.xlu0 %231
    %235 = vset.pattern.permute.xlu0 0
    %236 = vperm.xlu0 %235, %v228
    %v237 = vpop.permute.xlu0 %236
    %v239 = vmul.f32 %v221, %v232
    %v240 = vmul.f32 %v224, %v237
    %241 = vst.msk [vmem:[#allocation2] sm:$0xff] %vm51, %v239
    %242 = vst.msk [vmem:[#allocation2 + $0x8] sm:$0xff] %vm51, %v240
    // Predicated region
    $region26: #{_bert_ffn_impl.1} parent=1 // pred_check
      _
    $region27: #{_bert_ffn_impl.1} parent=1 // pred_check_branch
      %244 = sbr.rel (0) target = $region29
    $region28: #{_bert_ffn_impl.1} parent=1 // pred_region
      %s246 = ssub.s32 256, 256
      %247 = vsyncadd [#allocation3], %s246
      %s248 = sshll.u32 [#allocation2], 4
      %s249 = int_to_ptr.vmem [resolvable:$true] %s248
      %254 = dma.vmem_to_hbm [thread:$0]  %s249, 256, %s6, [#allocation3], 128, 128, 8
    $region29: #{_bert_ffn_impl.1} parent=1 // pred_fallthru
      _
    // Predicated region
    $region30: #{_bert_ffn_impl.1} parent=1 // pred_check
      _
    $region31: #{_bert_ffn_impl.1} parent=1 // pred_check_branch
      %256 = sbr.rel (0) target = $region33
    $region32: #{_bert_ffn_impl.1} parent=1 // pred_region
      %257 = dma.done [#allocation3], 256
    $region33: #{_bert_ffn_impl.1} parent=1 // pred_fallthru
      _
    %258 = vsyncpa [#allocation3], 1

</llo_original>
